<compile_context>
chip_gen: v7x
topology: tpu7x:2x2x1
jax: 0.10.0
libtpu: 0.0.40
codegen_flags: <defaults>
</compile_context>

<pallas_src>
import numpy as np
import jax
import jax.numpy as jnp
from jax.experimental import pallas as pl
from jax.experimental.pallas import tpu as pltpu


def _adaptive_avg_matrix(out_size: int, in_size: int) -> np.ndarray:
    """Row i averages input[start:end] with PyTorch's adaptive-pool window rule."""
    m = np.zeros((out_size, in_size), dtype=np.float32)
    for i in range(out_size):
        start = (i * in_size) // out_size
        end = -((-(i + 1) * in_size) // out_size)  # ceil((i+1)*in/out)
        m[i, start:end] = 1.0 / (end - start)
    return m


def _round_up(a: int, b: int) -> int:
    return ((a + b - 1) // b) * b


def _adaptive_pool_kernel(x_ref, m_ref, o_ref):
    # x_ref: (TN, H*W)        block of flattened input planes
    # m_ref: (H*W, F_pad)     combined separable pooling weight (VMEM resident)
    # o_ref: (TN, F_pad)      block of flattened (lane-padded) output planes
    o_ref[...] = jnp.dot(
        x_ref[...], m_ref[...], preferred_element_type=jnp.float32
    ).astype(o_ref.dtype)


def adaptive_pool(x: jax.Array, channel_out: int, hw_out: int,
                  *, block_rows: int | None = None) -> jax.Array:
    """Pallas implementation of Adaptive_pool.forward.

    Accepts 3-D (B, C', C') or 4-D (B, C, H, W) input, mirroring the module.
    Returns (-1, channel_out, hw_out, hw_out).
    """
    if x.ndim == 3:
        x = x[:, None, :, :]          # unsqueeze_(1)
    B, C, H, W = x.shape
    N = B * C
    hw2 = hw_out * hw_out
    K = H * W                          # flattened plane length (contraction dim)
    F = channel_out * hw2              # flattened output plane length
    F_pad = _round_up(F, 128)          # lane-dense output width (unmasked stores)

    # Combined separable pooling weight: M[(h,w),(c,p)] = L[c,h] * R[p,w],
    # zero-padded along columns up to F_pad (built at trace time in numpy).
    L = _adaptive_avg_matrix(channel_out, H)          # (C_out, H)
    R = _adaptive_avg_matrix(hw2, W)                  # (hw2, W)
    M_np = np.zeros((K, F_pad), dtype=np.float32)
    M_np[:, :F] = np.einsum("ch,pw->hwcp", L, R).reshape(K, F)
    # Keep x in its native dtype (no in-kernel upcast). For bf16 inputs cast the
    # small weight to bf16 too (few-ULP weight rounding; accumulation stays f32).
    w_dtype = jnp.bfloat16 if x.dtype == jnp.bfloat16 else jnp.float32
    M = jnp.asarray(M_np, dtype=w_dtype)

    x_flat = x.reshape(N, K)

    itemsize = jnp.dtype(x.dtype).itemsize
    w_itemsize = jnp.dtype(w_dtype).itemsize

    # --- choose TN (planes per grid step) ------------------------------------
    if block_rows is not None:
        tn = int(block_rows)
    else:
        # ~8 MiB budget for the double-buffered (input + output) blocks: big
        # enough to sit near the HBM roofline, small enough for v7x's 64 MiB
        # VMEM (and every chip's scoped default once the limit below is set).
        block_budget = 8 * 1024 * 1024
        bytes_per_row = 2 * (K + F_pad) * itemsize
        tn = block_budget // max(bytes_per_row, 1)
        tn = int(min(2048, tn))
    tn = min(tn, _round_up(N, 8))
    tn = max(8, tn - (tn % 8))         # sublane-aligned block rows

    # No row padding: Pallas handles the ragged last block (OOB reads are
    # unspecified but only feed OOB output rows, whose writes are dropped).
    grid = (pl.cdiv(N, tn),)

    # --- explicit scoped-VMEM limit (double-buffered blocks + weight) --------
    vmem_need = 2 * tn * (K + F_pad) * itemsize + 2 * K * F_pad * w_itemsize
    vmem_limit = int(max(vmem_need + (4 << 20), 32 << 20))

    pooled = pl.pallas_call(
        _adaptive_pool_kernel,
        out_shape=jax.ShapeDtypeStruct((N, F_pad), x.dtype),
        grid_spec=pltpu.PrefetchScalarGridSpec(
            num_scalar_prefetch=0,
            grid=grid,
            in_specs=[
                pl.BlockSpec((tn, K), lambda n: (n, 0)),      # TN flattened planes
                pl.BlockSpec((K, F_pad), lambda n: (0, 0)),   # constant weight
            ],
            out_specs=pl.BlockSpec((tn, F_pad), lambda n: (n, 0)),
        ),
        compiler_params=pltpu.CompilerParams(
            dimension_semantics=("parallel",),
            vmem_limit_bytes=vmem_limit,
        ),
    )(x_flat, M)

    if F_pad != F:
        pooled = pooled[:, :F]                         # drop lane padding
    return pooled.reshape(-1, channel_out, hw_out, hw_out)


def _reference(x: jax.Array, channel_out: int, hw_out: int) -> jax.Array:
    """Pure-JAX reference of AdaptiveAvgPool2d((channel_out, hw_out**2))."""
    if x.ndim == 3:
        x = x[:, None, :, :]
    B, C, H, W = x.shape
    L = jnp.asarray(_adaptive_avg_matrix(channel_out, H))
    R = jnp.asarray(_adaptive_avg_matrix(hw_out * hw_out, W))
    pooled = jnp.einsum("oh,bchw,pw->bcop", L, x.astype(jnp.float32), R)
    return pooled.reshape(-1, channel_out, hw_out, hw_out).astype(x.dtype)


if __name__ == "__main__":
    k1, k2, k3 = jax.random.split(jax.random.PRNGKey(0), 3)

    # Config 1: documented 3-D use (B x C' x C'), lane-dense output
    # (C_out*hw2 = 128), N=4 < TN exercises the ragged last block.
    B, Cp = 4, 32
    channel_out, hw_out = 8, 4
    x = jax.random.normal(k1, (B, Cp, Cp), dtype=jnp.float32)
    out = jax.block_until_ready(adaptive_pool(x, channel_out, hw_out))
    ref = _reference(x, channel_out, hw_out)
    assert out.shape == (B, channel_out, hw_out, hw_out), out.shape
    np.testing.assert_allclose(np.asarray(out), np.asarray(ref), rtol=1e-5, atol=1e-5)

    # Config 2: multi-block grid (N=48 planes, 16 per block), output plane
    # width 64 < 128 exercises the lane-padded (F_pad) path.
    B2, Cp2 = 48, 16
    channel_out2, hw_out2 = 4, 4
    x2 = jax.random.normal(k2, (B2, Cp2, Cp2), dtype=jnp.float32)
    out2 = jax.block_until_ready(adaptive_pool(x2, channel_out2, hw_out2, block_rows=16))
    ref2 = _reference(x2, channel_out2, hw_out2)
    assert out2.shape == (B2, channel_out2, hw_out2, hw_out2), out2.shape
    np.testing.assert_allclose(np.asarray(out2), np.asarray(ref2), rtol=1e-5, atol=1e-5)

    # Config 3: bf16 path (bf16 input + bf16 weight, f32 accumulation).
    B3, Cp3 = 2, 32
    channel_out3, hw_out3 = 8, 4
    x3 = jax.random.normal(k3, (B3, Cp3, Cp3), dtype=jnp.bfloat16)
    out3 = jax.block_until_ready(adaptive_pool(x3, channel_out3, hw_out3))
    ref3 = _reference(x3, channel_out3, hw_out3)
    assert out3.shape == (B3, channel_out3, hw_out3, hw_out3), out3.shape
    np.testing.assert_allclose(np.asarray(out3, dtype=np.float32),
                               np.asarray(ref3, dtype=np.float32),
                               rtol=5e-2, atol=5e-2)

    print("KERNEL_OK")
</pallas_src>

<mosaic_0001>
module attributes {stable_mosaic.version = 11 : i64} {
  func.func @_adaptive_pool_kernel(%arg0: i32, %arg1: memref<8x1024xf32, #tpu.memory_space<vmem>>, %arg2: memref<1024x128xf32, #tpu.memory_space<vmem>>, %arg3: memref<8x128xf32, #tpu.memory_space<vmem>>) attributes {dimension_semantics = [#tpu.dimension_semantics<parallel>], iteration_bounds = array<i64: 1>, scalar_prefetch = 0 : i64, scratch_operands = 0 : i64, tpu.core_type = #tpu.core_type<tc>, window_params = [{transform_indices = @transform_0, window_bounds = array<i64: 8, 1024>}, {pipeline_mode = #tpu.pipeline_mode<synchronous>, transform_indices = @transform_1, window_bounds = array<i64: 1024, 128>}, {transform_indices = @transform_2, window_bounds = array<i64: 8, 128>}]} {
    %c0 = arith.constant 0 : index
    %c0_0 = arith.constant 0 : index
    %0 = vector.load %arg1[%c0, %c0_0] : memref<8x1024xf32, #tpu.memory_space<vmem>>, vector<8x1024xf32>
    %c0_1 = arith.constant 0 : index
    %c0_2 = arith.constant 0 : index
    %1 = vector.load %arg2[%c0_1, %c0_2] : memref<1024x128xf32, #tpu.memory_space<vmem>>, vector<1024x128xf32>
    %cst = arith.constant dense<0.000000e+00> : vector<8x128xf32>
    %2 = tpu.matmul %0, %1, %cst {dimension_numbers = #tpu.dot_dimension_numbers<[1], [0], [0], [1], [0, 0, 1, 1], [], []>} : vector<8x1024xf32>, vector<1024x128xf32>, vector<8x128xf32> -> vector<8x128xf32>
    %c0_3 = arith.constant 0 : index
    %c0_4 = arith.constant 0 : index
    %3 = vector.load %arg3[%c0_3, %c0_4] : memref<8x128xf32, #tpu.memory_space<vmem>>, vector<8x128xf32>
    tpu.vector_store %arg3[%c0_3, %c0_4], %2 {strides = array<i32>} : memref<8x128xf32, #tpu.memory_space<vmem>>, vector<8x128xf32>,
    return
  }
  func.func @transform_0(%arg0: i32) -> (i32, i32) {
    %c0_i32 = arith.constant 0 : i32
    %c0_i32_0 = arith.constant 0 : i32
    return %arg0, %c0_i32 : i32, i32
  }
  func.func @transform_1(%arg0: i32) -> (i32, i32) {
    %c0_i32 = arith.constant 0 : i32
    %c0_i32_0 = arith.constant 0 : i32
    %c0_i32_1 = arith.constant 0 : i32
    return %c0_i32, %c0_i32_0 : i32, i32
  }
  func.func @transform_2(%arg0: i32) -> (i32, i32) {
    %c0_i32 = arith.constant 0 : i32
    %c0_i32_0 = arith.constant 0 : i32
    return %arg0, %c0_i32 : i32, i32
  }
}

</mosaic_0001>

<llo_original>
// kernel: tpu_custom_call.1
$region0: #{tpu_custom_call.1}
  #allocation0 [shape = 'u32[]', space=smem, size = 0x4, offset = 0x4, fixed_abs, tag = 'smem constant byte address 0x4 - core index']
  #allocation1 [shape = 'u32[144,128]{1,0:T(1,128)}', space=vmem, size = 0x12000, scoped, tag = 'internal scratch']
  %s0 = inlined_call_operand.hbm [shape: f32[4,1024], index: 0, kind: input, shape index: {}]
  %s1 = inlined_call_operand.hbm [shape: f32[1024,128], index: 1, kind: input, shape index: {}]
  %s2 = inlined_call_operand.hbm [shape: f32[4,128], index: 2, kind: output, shape index: {}]
  %s3 = sld [smem:[#allocation0]]
  $region26: #{tpu_custom_call.1} parent=0
    _
  %s5 = ssub.s32 1, %s3
  %s6 = scalar_select 0, %s5, %s3
  $region1: #{tpu_custom_call.1} parent=0
    #allocation2 [shape = 'u8[32768]{0}', space=vmem, size = 0x8000, scoped, tag = 'input window, operand 0, single buffered']
    #allocation3 [shape = 's32[1]{0}', space=sflag, size = 0x4, scoped, tag = 'scoped memory for tpu_custom_call.1']
    #allocation4 [shape = 's32[1]{0}', space=sflag, size = 0x4, scoped, tag = 'scoped memory for tpu_custom_call.1']
    #allocation5 [shape = 'u8[524288]{0}', space=vmem, size = 0x80000, scoped, tag = 'input window, operand 1, single buffered']
    #allocation6 [shape = 's32[1]{0}', space=sflag, size = 0x4, scoped, tag = 'scoped memory for tpu_custom_call.1']
    #allocation7 [shape = 'u8[4096]{0}', space=vmem, size = 0x1000, scoped, tag = 'output window, operand 0, single buffered']
    %7 = vsyncpa [#allocation3], 0
    %8 = vsyncpa [#allocation6], 0
    %9 = vsyncpa [#allocation4], 0
    // Predicated region
    $region2: #{tpu_custom_call.1} parent=1 // pred_check
      _
    $region3: #{tpu_custom_call.1} parent=1 // pred_check_branch
      %11 = sbr.rel (0) target = $region5
    $region4: #{tpu_custom_call.1} parent=1 // pred_region
      %s13 = ssub.s32 1024, 512
      %14 = vsyncadd [#allocation3], %s13
      %s15 = sshll.u32 [#allocation2], 4
      %s16 = int_to_ptr.vmem [resolvable:$true] %s15
      %21 = dma.hbm_to_vmem [thread:$0]  %s0, 512, %s16, [#allocation3], 512, 512, 32
    $region5: #{tpu_custom_call.1} parent=1 // pred_fallthru
      _
    // Predicated region
    $region6: #{tpu_custom_call.1} parent=1 // pred_check
      _
    $region7: #{tpu_custom_call.1} parent=1 // pred_check_branch
      %23 = sbr.rel (0) target = $region9
    $region8: #{tpu_custom_call.1} parent=1 // pred_region
      %s25 = ssub.s32 16384, 16384
      %26 = vsyncadd [#allocation6], %s25
      %s27 = sshll.u32 [#allocation5], 4
      %s28 = int_to_ptr.vmem [resolvable:$true] %s27
      %33 = dma.hbm_to_vmem [thread:$0]  %s1, 16384, %s28, [#allocation6], 128, 128, 8
    $region9: #{tpu_custom_call.1} parent=1 // pred_fallthru
      _
    // Predicated region
    $region10: #{tpu_custom_call.1} parent=1 // pred_check
      _
    $region11: #{tpu_custom_call.1} parent=1 // pred_check_branch
      %35 = sbr.rel (0) target = $region13
    $region12: #{tpu_custom_call.1} parent=1 // pred_region
      %36 = dma.done [#allocation3], 1024
    $region13: #{tpu_custom_call.1} parent=1 // pred_fallthru
      _
    // Predicated region
    $region14: #{tpu_custom_call.1} parent=1 // pred_check
      _
    $region15: #{tpu_custom_call.1} parent=1 // pred_check_branch
      %38 = sbr.rel (0) target = $region17
    $region16: #{tpu_custom_call.1} parent=1 // pred_region
      %39 = dma.done [#allocation6], 16384
    $region17: #{tpu_custom_call.1} parent=1 // pred_fallthru
      _
    %v40 = vld [vmem:[#allocation2] sm:$0xff]
    %v41 = vld [vmem:[#allocation2 + $0x8] sm:$0xff]
    %v42 = vld [vmem:[#allocation2 + $0x10] sm:$0xff]
    %v43 = vld [vmem:[#allocation2 + $0x18] sm:$0xff]
    %v44 = vld [vmem:[#allocation2 + $0x20] sm:$0xff]
    %v45 = vld [vmem:[#allocation2 + $0x28] sm:$0xff]
    %v46 = vld [vmem:[#allocation2 + $0x30] sm:$0xff]
    %v47 = vld [vmem:[#allocation2 + $0x38] sm:$0xff]
    %v48 = vld [vmem:[#allocation5] sm:$0xff]
    %v49 = vld [vmem:[#allocation5 + $0x8] sm:$0xff]
    %v50 = vld [vmem:[#allocation5 + $0x10] sm:$0xff]
    %v51 = vld [vmem:[#allocation5 + $0x18] sm:$0xff]
    %v52 = vld [vmem:[#allocation5 + $0x20] sm:$0xff]
    %v53 = vld [vmem:[#allocation5 + $0x28] sm:$0xff]
    %v54 = vld [vmem:[#allocation5 + $0x30] sm:$0xff]
    %v55 = vld [vmem:[#allocation5 + $0x38] sm:$0xff]
    %v56 = vld [vmem:[#allocation5 + $0x40] sm:$0xff]
    %v57 = vld [vmem:[#allocation5 + $0x48] sm:$0xff]
    %v58 = vld [vmem:[#allocation5 + $0x50] sm:$0xff]
    %v59 = vld [vmem:[#allocation5 + $0x58] sm:$0xff]
    %v60 = vld [vmem:[#allocation5 + $0x60] sm:$0xff]
    %v61 = vld [vmem:[#allocation5 + $0x68] sm:$0xff]
    %v62 = vld [vmem:[#allocation5 + $0x70] sm:$0xff]
    %v63 = vld [vmem:[#allocation5 + $0x78] sm:$0xff]
    %v64 = vld [vmem:[#allocation5 + $0x80] sm:$0xff]
    %v65 = vld [vmem:[#allocation5 + $0x88] sm:$0xff]
    %v66 = vld [vmem:[#allocation5 + $0x90] sm:$0xff]
    %v67 = vld [vmem:[#allocation5 + $0x98] sm:$0xff]
    %v68 = vld [vmem:[#allocation5 + $0xa0] sm:$0xff]
    %v69 = vld [vmem:[#allocation5 + $0xa8] sm:$0xff]
    %v70 = vld [vmem:[#allocation5 + $0xb0] sm:$0xff]
    %v71 = vld [vmem:[#allocation5 + $0xb8] sm:$0xff]
    %v72 = vld [vmem:[#allocation5 + $0xc0] sm:$0xff]
    %v73 = vld [vmem:[#allocation5 + $0xc8] sm:$0xff]
    %v74 = vld [vmem:[#allocation5 + $0xd0] sm:$0xff]
    %v75 = vld [vmem:[#allocation5 + $0xd8] sm:$0xff]
    %v76 = vld [vmem:[#allocation5 + $0xe0] sm:$0xff]
    %v77 = vld [vmem:[#allocation5 + $0xe8] sm:$0xff]
    %v78 = vld [vmem:[#allocation5 + $0xf0] sm:$0xff]
    %v79 = vld [vmem:[#allocation5 + $0xf8] sm:$0xff]
    %v80 = vld [vmem:[#allocation5 + $0x100] sm:$0xff]
    %v81 = vld [vmem:[#allocation5 + $0x108] sm:$0xff]
    %v82 = vld [vmem:[#allocation5 + $0x110] sm:$0xff]
    %v83 = vld [vmem:[#allocation5 + $0x118] sm:$0xff]
    %v84 = vld [vmem:[#allocation5 + $0x120] sm:$0xff]
    %v85 = vld [vmem:[#allocation5 + $0x128] sm:$0xff]
    %v86 = vld [vmem:[#allocation5 + $0x130] sm:$0xff]
    %v87 = vld [vmem:[#allocation5 + $0x138] sm:$0xff]
    %v88 = vld [vmem:[#allocation5 + $0x140] sm:$0xff]
    %v89 = vld [vmem:[#allocation5 + $0x148] sm:$0xff]
    %v90 = vld [vmem:[#allocation5 + $0x150] sm:$0xff]
    %v91 = vld [vmem:[#allocation5 + $0x158] sm:$0xff]
    %v92 = vld [vmem:[#allocation5 + $0x160] sm:$0xff]
    %v93 = vld [vmem:[#allocation5 + $0x168] sm:$0xff]
    %v94 = vld [vmem:[#allocation5 + $0x170] sm:$0xff]
    %v95 = vld [vmem:[#allocation5 + $0x178] sm:$0xff]
    %v96 = vld [vmem:[#allocation5 + $0x180] sm:$0xff]
    %v97 = vld [vmem:[#allocation5 + $0x188] sm:$0xff]
    %v98 = vld [vmem:[#allocation5 + $0x190] sm:$0xff]
    %v99 = vld [vmem:[#allocation5 + $0x198] sm:$0xff]
    %v100 = vld [vmem:[#allocation5 + $0x1a0] sm:$0xff]
    %v101 = vld [vmem:[#allocation5 + $0x1a8] sm:$0xff]
    %v102 = vld [vmem:[#allocation5 + $0x1b0] sm:$0xff]
    %v103 = vld [vmem:[#allocation5 + $0x1b8] sm:$0xff]
    %v104 = vld [vmem:[#allocation5 + $0x1c0] sm:$0xff]
    %v105 = vld [vmem:[#allocation5 + $0x1c8] sm:$0xff]
    %v106 = vld [vmem:[#allocation5 + $0x1d0] sm:$0xff]
    %v107 = vld [vmem:[#allocation5 + $0x1d8] sm:$0xff]
    %v108 = vld [vmem:[#allocation5 + $0x1e0] sm:$0xff]
    %v109 = vld [vmem:[#allocation5 + $0x1e8] sm:$0xff]
    %v110 = vld [vmem:[#allocation5 + $0x1f0] sm:$0xff]
    %v111 = vld [vmem:[#allocation5 + $0x1f8] sm:$0xff]
    %v112 = vld [vmem:[#allocation5 + $0x200] sm:$0xff]
    %v113 = vld [vmem:[#allocation5 + $0x208] sm:$0xff]
    %v114 = vld [vmem:[#allocation5 + $0x210] sm:$0xff]
    %v115 = vld [vmem:[#allocation5 + $0x218] sm:$0xff]
    %v116 = vld [vmem:[#allocation5 + $0x220] sm:$0xff]
    %v117 = vld [vmem:[#allocation5 + $0x228] sm:$0xff]
    %v118 = vld [vmem:[#allocation5 + $0x230] sm:$0xff]
    %v119 = vld [vmem:[#allocation5 + $0x238] sm:$0xff]
    %v120 = vld [vmem:[#allocation5 + $0x240] sm:$0xff]
    %v121 = vld [vmem:[#allocation5 + $0x248] sm:$0xff]
    %v122 = vld [vmem:[#allocation5 + $0x250] sm:$0xff]
    %v123 = vld [vmem:[#allocation5 + $0x258] sm:$0xff]
    %v124 = vld [vmem:[#allocation5 + $0x260] sm:$0xff]
    %v125 = vld [vmem:[#allocation5 + $0x268] sm:$0xff]
    %v126 = vld [vmem:[#allocation5 + $0x270] sm:$0xff]
    %v127 = vld [vmem:[#allocation5 + $0x278] sm:$0xff]
    %v128 = vld [vmem:[#allocation5 + $0x280] sm:$0xff]
    %v129 = vld [vmem:[#allocation5 + $0x288] sm:$0xff]
    %v130 = vld [vmem:[#allocation5 + $0x290] sm:$0xff]
    %v131 = vld [vmem:[#allocation5 + $0x298] sm:$0xff]
    %v132 = vld [vmem:[#allocation5 + $0x2a0] sm:$0xff]
    %v133 = vld [vmem:[#allocation5 + $0x2a8] sm:$0xff]
    %v134 = vld [vmem:[#allocation5 + $0x2b0] sm:$0xff]
    %v135 = vld [vmem:[#allocation5 + $0x2b8] sm:$0xff]
    %v136 = vld [vmem:[#allocation5 + $0x2c0] sm:$0xff]
    %v137 = vld [vmem:[#allocation5 + $0x2c8] sm:$0xff]
    %v138 = vld [vmem:[#allocation5 + $0x2d0] sm:$0xff]
    %v139 = vld [vmem:[#allocation5 + $0x2d8] sm:$0xff]
    %v140 = vld [vmem:[#allocation5 + $0x2e0] sm:$0xff]
    %v141 = vld [vmem:[#allocation5 + $0x2e8] sm:$0xff]
    %v142 = vld [vmem:[#allocation5 + $0x2f0] sm:$0xff]
    %v143 = vld [vmem:[#allocation5 + $0x2f8] sm:$0xff]
    %v144 = vld [vmem:[#allocation5 + $0x300] sm:$0xff]
    %v145 = vld [vmem:[#allocation5 + $0x308] sm:$0xff]
    %v146 = vld [vmem:[#allocation5 + $0x310] sm:$0xff]
    %v147 = vld [vmem:[#allocation5 + $0x318] sm:$0xff]
    %v148 = vld [vmem:[#allocation5 + $0x320] sm:$0xff]
    %v149 = vld [vmem:[#allocation5 + $0x328] sm:$0xff]
    %v150 = vld [vmem:[#allocation5 + $0x330] sm:$0xff]
    %v151 = vld [vmem:[#allocation5 + $0x338] sm:$0xff]
    %v152 = vld [vmem:[#allocation5 + $0x340] sm:$0xff]
    %v153 = vld [vmem:[#allocation5 + $0x348] sm:$0xff]
    %v154 = vld [vmem:[#allocation5 + $0x350] sm:$0xff]
    %v155 = vld [vmem:[#allocation5 + $0x358] sm:$0xff]
    %v156 = vld [vmem:[#allocation5 + $0x360] sm:$0xff]
    %v157 = vld [vmem:[#allocation5 + $0x368] sm:$0xff]
    %v158 = vld [vmem:[#allocation5 + $0x370] sm:$0xff]
    %v159 = vld [vmem:[#allocation5 + $0x378] sm:$0xff]
    %v160 = vld [vmem:[#allocation5 + $0x380] sm:$0xff]
    %v161 = vld [vmem:[#allocation5 + $0x388] sm:$0xff]
    %v162 = vld [vmem:[#allocation5 + $0x390] sm:$0xff]
    %v163 = vld [vmem:[#allocation5 + $0x398] sm:$0xff]
    %v164 = vld [vmem:[#allocation5 + $0x3a0] sm:$0xff]
    %v165 = vld [vmem:[#allocation5 + $0x3a8] sm:$0xff]
    %v166 = vld [vmem:[#allocation5 + $0x3b0] sm:$0xff]
    %v167 = vld [vmem:[#allocation5 + $0x3b8] sm:$0xff]
    %v168 = vld [vmem:[#allocation5 + $0x3c0] sm:$0xff]
    %v169 = vld [vmem:[#allocation5 + $0x3c8] sm:$0xff]
    %v170 = vld [vmem:[#allocation5 + $0x3d0] sm:$0xff]
    %v171 = vld [vmem:[#allocation5 + $0x3d8] sm:$0xff]
    %v172 = vld [vmem:[#allocation5 + $0x3e0] sm:$0xff]
    %v173 = vld [vmem:[#allocation5 + $0x3e8] sm:$0xff]
    %v174 = vld [vmem:[#allocation5 + $0x3f0] sm:$0xff]
    %v175 = vld [vmem:[#allocation5 + $0x3f8] sm:$0xff]
    %v184 = vcombine.low %v40, %v44
    %v185 = vcombine.high %v40, %v44
    %v186 = vcombine.low %v41, %v45
    %v187 = vcombine.high %v41, %v45
    %v188 = vcombine.low %v42, %v46
    %v189 = vcombine.high %v42, %v46
    %v190 = vcombine.low %v43, %v47
    %v191 = vcombine.high %v43, %v47
    %200 = vmatprep.subr.mxu0 0.0
    %201 = vmatpush1.msra.mxu0 %v48
    %202 = vmatprep.subr.mxu0 0.0
    %203 = vmatpush1.msra.mxu0 %v49
    %204 = vmatprep.subr.mxu0 0.0
    %205 = vmatpush1.msra.mxu0 %v50
    %206 = vmatprep.subr.mxu0 0.0
    %207 = vmatpush1.msra.mxu0 %v51
    %208 = vmatprep.subr.mxu0 0.0
    %209 = vmatpush1.msra.mxu0 %v52
    %210 = vmatprep.subr.mxu0 0.0
    %211 = vmatpush1.msra.mxu0 %v53
    %212 = vmatprep.subr.mxu0 0.0
    %213 = vmatpush1.msra.mxu0 %v54
    %214 = vmatprep.subr.mxu0 0.0
    %215 = vmatpush1.msra.mxu0 %v55
    %216 = vmatprep.subr.mxu0 0.0
    %217 = vmatpush1.msra.mxu0 %v56
    %218 = vmatprep.subr.mxu0 0.0
    %219 = vmatpush1.msra.mxu0 %v57
    %220 = vmatprep.subr.mxu0 0.0
    %221 = vmatpush1.msra.mxu0 %v58
    %222 = vmatprep.subr.mxu0 0.0
    %223 = vmatpush1.msra.mxu0 %v59
    %224 = vmatprep.subr.mxu0 0.0
    %225 = vmatpush1.msra.mxu0 %v60
    %226 = vmatprep.subr.mxu0 0.0
    %227 = vmatpush1.msra.mxu0 %v61
    %228 = vmatprep.subr.mxu0 0.0
    %229 = vmatpush1.msra.mxu0 %v62
    %230 = vmatprep.subr.mxu0 0.0
    %231 = vmatpush1.msra.mxu0 %v63
    %232 = vmatprep.subr.mxu0 0.0
    %233 = vmatpush1.msra.mxu0 %v64
    %234 = vmatprep.subr.mxu0 0.0
    %235 = vmatpush1.msra.mxu0 %v65
    %236 = vmatprep.subr.mxu0 0.0
    %237 = vmatpush1.msra.mxu0 %v66
    %238 = vmatprep.subr.mxu0 0.0
    %239 = vmatpush1.msra.mxu0 %v67
    %240 = vmatprep.subr.mxu0 0.0
    %241 = vmatpush1.msra.mxu0 %v68
    %242 = vmatprep.subr.mxu0 0.0
    %243 = vmatpush1.msra.mxu0 %v69
    %244 = vmatprep.subr.mxu0 0.0
    %245 = vmatpush1.msra.mxu0 %v70
    %246 = vmatprep.subr.mxu0 0.0
    %247 = vmatpush1.msra.mxu0 %v71
    %248 = vmatprep.subr.mxu0 0.0
    %249 = vmatpush1.msra.mxu0 %v72
    %250 = vmatprep.subr.mxu0 0.0
    %251 = vmatpush1.msra.mxu0 %v73
    %252 = vmatprep.subr.mxu0 0.0
    %253 = vmatpush1.msra.mxu0 %v74
    %254 = vmatprep.subr.mxu0 0.0
    %255 = vmatpush1.msra.mxu0 %v75
    %256 = vmatprep.subr.mxu0 0.0
    %257 = vmatpush1.msra.mxu0 %v76
    %258 = vmatprep.subr.mxu0 0.0
    %259 = vmatpush1.msra.mxu0 %v77
    %260 = vmatprep.subr.mxu0 0.0
    %261 = vmatpush1.msra.mxu0 %v78
    %262 = vmatprep.subr.mxu0 0.0
    %263 = vmatpush1.msra.mxu0 %v79
    %264 = vmatprep.mubr.f32.mxu0 %v185
    %265 = vmatmul.mubr.f32.gmra.mrb[0].mxu0 %v184
    %v266 = vpop.f32.mrb[0].mxu0
    %v267 = vadd.f32 0.0, %v266
    %v268 = vpop.f32.mrb[0].mxu0
    %269 = vdwg.mxu0
    %270 = vmatprep.subr.mxu0 0.0
    %271 = vmatpush1.msra.mxu0 %v80
    %272 = vmatprep.subr.mxu0 0.0
    %273 = vmatpush1.msra.mxu0 %v81
    %274 = vmatprep.subr.mxu0 0.0
    %275 = vmatpush1.msra.mxu0 %v82
    %276 = vmatprep.subr.mxu0 0.0
    %277 = vmatpush1.msra.mxu0 %v83
    %278 = vmatprep.subr.mxu0 0.0
    %279 = vmatpush1.msra.mxu0 %v84
    %280 = vmatprep.subr.mxu0 0.0
    %281 = vmatpush1.msra.mxu0 %v85
    %282 = vmatprep.subr.mxu0 0.0
    %283 = vmatpush1.msra.mxu0 %v86
    %284 = vmatprep.subr.mxu0 0.0
    %285 = vmatpush1.msra.mxu0 %v87
    %286 = vmatprep.subr.mxu0 0.0
    %287 = vmatpush1.msra.mxu0 %v88
    %288 = vmatprep.subr.mxu0 0.0
    %289 = vmatpush1.msra.mxu0 %v89
    %290 = vmatprep.subr.mxu0 0.0
    %291 = vmatpush1.msra.mxu0 %v90
    %292 = vmatprep.subr.mxu0 0.0
    %293 = vmatpush1.msra.mxu0 %v91
    %294 = vmatprep.subr.mxu0 0.0
    %295 = vmatpush1.msra.mxu0 %v92
    %296 = vmatprep.subr.mxu0 0.0
    %297 = vmatpush1.msra.mxu0 %v93
    %298 = vmatprep.subr.mxu0 0.0
    %299 = vmatpush1.msra.mxu0 %v94
    %300 = vmatprep.subr.mxu0 0.0
    %301 = vmatpush1.msra.mxu0 %v95
    %302 = vmatprep.subr.mxu0 0.0
    %303 = vmatpush1.msra.mxu0 %v96
    %304 = vmatprep.subr.mxu0 0.0
    %305 = vmatpush1.msra.mxu0 %v97
    %306 = vmatprep.subr.mxu0 0.0
    %307 = vmatpush1.msra.mxu0 %v98
    %308 = vmatprep.subr.mxu0 0.0
    %309 = vmatpush1.msra.mxu0 %v99
    %310 = vmatprep.subr.mxu0 0.0
    %311 = vmatpush1.msra.mxu0 %v100
    %312 = vmatprep.subr.mxu0 0.0
    %313 = vmatpush1.msra.mxu0 %v101
    %314 = vmatprep.subr.mxu0 0.0
    %315 = vmatpush1.msra.mxu0 %v102
    %316 = vmatprep.subr.mxu0 0.0
    %317 = vmatpush1.msra.mxu0 %v103
    %318 = vmatprep.subr.mxu0 0.0
    %319 = vmatpush1.msra.mxu0 %v104
    %320 = vmatprep.subr.mxu0 0.0
    %321 = vmatpush1.msra.mxu0 %v105
    %322 = vmatprep.subr.mxu0 0.0
    %323 = vmatpush1.msra.mxu0 %v106
    %324 = vmatprep.subr.mxu0 0.0
    %325 = vmatpush1.msra.mxu0 %v107
    %326 = vmatprep.subr.mxu0 0.0
    %327 = vmatpush1.msra.mxu0 %v108
    %328 = vmatprep.subr.mxu0 0.0
    %329 = vmatpush1.msra.mxu0 %v109
    %330 = vmatprep.subr.mxu0 0.0
    %331 = vmatpush1.msra.mxu0 %v110
    %332 = vmatprep.subr.mxu0 0.0
    %333 = vmatpush1.msra.mxu0 %v111
    %334 = vmatprep.mubr.f32.mxu0 %v187
    %335 = vmatmul.mubr.f32.gmra.mrb[0].mxu0 %v186
    %v336 = vpop.f32.mrb[0].mxu0
    %v337 = vadd.f32 %v267, %v336
    %v338 = vpop.f32.mrb[0].mxu0
    %339 = vdwg.mxu0
    %340 = vmatprep.subr.mxu0 0.0
    %341 = vmatpush1.msra.mxu0 %v112
    %342 = vmatprep.subr.mxu0 0.0
    %343 = vmatpush1.msra.mxu0 %v113
    %344 = vmatprep.subr.mxu0 0.0
    %345 = vmatpush1.msra.mxu0 %v114
    %346 = vmatprep.subr.mxu0 0.0
    %347 = vmatpush1.msra.mxu0 %v115
    %348 = vmatprep.subr.mxu0 0.0
    %349 = vmatpush1.msra.mxu0 %v116
    %350 = vmatprep.subr.mxu0 0.0
    %351 = vmatpush1.msra.mxu0 %v117
    %352 = vmatprep.subr.mxu0 0.0
    %353 = vmatpush1.msra.mxu0 %v118
    %354 = vmatprep.subr.mxu0 0.0
    %355 = vmatpush1.msra.mxu0 %v119
    %356 = vmatprep.subr.mxu0 0.0
    %357 = vmatpush1.msra.mxu0 %v120
    %358 = vmatprep.subr.mxu0 0.0
    %359 = vmatpush1.msra.mxu0 %v121
    %360 = vmatprep.subr.mxu0 0.0
    %361 = vmatpush1.msra.mxu0 %v122
    %362 = vmatprep.subr.mxu0 0.0
    %363 = vmatpush1.msra.mxu0 %v123
    %364 = vmatprep.subr.mxu0 0.0
    %365 = vmatpush1.msra.mxu0 %v124
    %366 = vmatprep.subr.mxu0 0.0
    %367 = vmatpush1.msra.mxu0 %v125
    %368 = vmatprep.subr.mxu0 0.0
    %369 = vmatpush1.msra.mxu0 %v126
    %370 = vmatprep.subr.mxu0 0.0
    %371 = vmatpush1.msra.mxu0 %v127
    %372 = vmatprep.subr.mxu0 0.0
    %373 = vmatpush1.msra.mxu0 %v128
    %374 = vmatprep.subr.mxu0 0.0
    %375 = vmatpush1.msra.mxu0 %v129
    %376 = vmatprep.subr.mxu0 0.0
    %377 = vmatpush1.msra.mxu0 %v130
    %378 = vmatprep.subr.mxu0 0.0
    %379 = vmatpush1.msra.mxu0 %v131
    %380 = vmatprep.subr.mxu0 0.0
    %381 = vmatpush1.msra.mxu0 %v132
    %382 = vmatprep.subr.mxu0 0.0
    %383 = vmatpush1.msra.mxu0 %v133
    %384 = vmatprep.subr.mxu0 0.0
    %385 = vmatpush1.msra.mxu0 %v134
    %386 = vmatprep.subr.mxu0 0.0
    %387 = vmatpush1.msra.mxu0 %v135
    %388 = vmatprep.subr.mxu0 0.0
    %389 = vmatpush1.msra.mxu0 %v136
    %390 = vmatprep.subr.mxu0 0.0
    %391 = vmatpush1.msra.mxu0 %v137
    %392 = vmatprep.subr.mxu0 0.0
    %393 = vmatpush1.msra.mxu0 %v138
    %394 = vmatprep.subr.mxu0 0.0
    %395 = vmatpush1.msra.mxu0 %v139
    %396 = vmatprep.subr.mxu0 0.0
    %397 = vmatpush1.msra.mxu0 %v140
    %398 = vmatprep.subr.mxu0 0.0
    %399 = vmatpush1.msra.mxu0 %v141
    %400 = vmatprep.subr.mxu0 0.0
    %401 = vmatpush1.msra.mxu0 %v142
    %402 = vmatprep.subr.mxu0 0.0
    %403 = vmatpush1.msra.mxu0 %v143
    %404 = vmatprep.mubr.f32.mxu0 %v189
    %405 = vmatmul.mubr.f32.gmra.mrb[0].mxu0 %v188
    %v406 = vpop.f32.mrb[0].mxu0
    %v407 = vadd.f32 %v337, %v406
    %v408 = vpop.f32.mrb[0].mxu0
    %409 = vdwg.mxu0
    %410 = vmatprep.subr.mxu0 0.0
    %411 = vmatpush1.msra.mxu0 %v144
    %412 = vmatprep.subr.mxu0 0.0
    %413 = vmatpush1.msra.mxu0 %v145
    %414 = vmatprep.subr.mxu0 0.0
    %415 = vmatpush1.msra.mxu0 %v146
    %416 = vmatprep.subr.mxu0 0.0
    %417 = vmatpush1.msra.mxu0 %v147
    %418 = vmatprep.subr.mxu0 0.0
    %419 = vmatpush1.msra.mxu0 %v148
    %420 = vmatprep.subr.mxu0 0.0
    %421 = vmatpush1.msra.mxu0 %v149
    %422 = vmatprep.subr.mxu0 0.0
    %423 = vmatpush1.msra.mxu0 %v150
    %424 = vmatprep.subr.mxu0 0.0
    %425 = vmatpush1.msra.mxu0 %v151
    %426 = vmatprep.subr.mxu0 0.0
    %427 = vmatpush1.msra.mxu0 %v152
    %428 = vmatprep.subr.mxu0 0.0
    %429 = vmatpush1.msra.mxu0 %v153
    %430 = vmatprep.subr.mxu0 0.0
    %431 = vmatpush1.msra.mxu0 %v154
    %432 = vmatprep.subr.mxu0 0.0
    %433 = vmatpush1.msra.mxu0 %v155
    %434 = vmatprep.subr.mxu0 0.0
    %435 = vmatpush1.msra.mxu0 %v156
    %436 = vmatprep.subr.mxu0 0.0
    %437 = vmatpush1.msra.mxu0 %v157
    %438 = vmatprep.subr.mxu0 0.0
    %439 = vmatpush1.msra.mxu0 %v158
    %440 = vmatprep.subr.mxu0 0.0
    %441 = vmatpush1.msra.mxu0 %v159
    %442 = vmatprep.subr.mxu0 0.0
    %443 = vmatpush1.msra.mxu0 %v160
    %444 = vmatprep.subr.mxu0 0.0
    %445 = vmatpush1.msra.mxu0 %v161
    %446 = vmatprep.subr.mxu0 0.0
    %447 = vmatpush1.msra.mxu0 %v162
    %448 = vmatprep.subr.mxu0 0.0
    %449 = vmatpush1.msra.mxu0 %v163
    %450 = vmatprep.subr.mxu0 0.0
    %451 = vmatpush1.msra.mxu0 %v164
    %452 = vmatprep.subr.mxu0 0.0
    %453 = vmatpush1.msra.mxu0 %v165
    %454 = vmatprep.subr.mxu0 0.0
    %455 = vmatpush1.msra.mxu0 %v166
    %456 = vmatprep.subr.mxu0 0.0
    %457 = vmatpush1.msra.mxu0 %v167
    %458 = vmatprep.subr.mxu0 0.0
    %459 = vmatpush1.msra.mxu0 %v168
    %460 = vmatprep.subr.mxu0 0.0
    %461 = vmatpush1.msra.mxu0 %v169
    %462 = vmatprep.subr.mxu0 0.0
    %463 = vmatpush1.msra.mxu0 %v170
    %464 = vmatprep.subr.mxu0 0.0
    %465 = vmatpush1.msra.mxu0 %v171
    %466 = vmatprep.subr.mxu0 0.0
    %467 = vmatpush1.msra.mxu0 %v172
    %468 = vmatprep.subr.mxu0 0.0
    %469 = vmatpush1.msra.mxu0 %v173
    %470 = vmatprep.subr.mxu0 0.0
    %471 = vmatpush1.msra.mxu0 %v174
    %472 = vmatprep.subr.mxu0 0.0
    %473 = vmatpush1.msra.mxu0 %v175
    %474 = vmatprep.mubr.f32.mxu0 %v191
    %475 = vmatmul.mubr.f32.gmra.mrb[0].mxu0 %v190
    %v476 = vpop.f32.mrb[0].mxu0
    %v477 = vadd.f32 %v407, %v476
    %v478 = vpop.f32.mrb[0].mxu0
    %479 = vdwg.mxu0
    %480 = vst [vmem:[#allocation7] sm:$0xff] %v477
    // Predicated region
    $region18: #{tpu_custom_call.1} parent=1 // pred_check
      _
    $region19: #{tpu_custom_call.1} parent=1 // pred_check_branch
      %482 = sbr.rel (0) target = $region21
    $region20: #{tpu_custom_call.1} parent=1 // pred_region
      %s484 = ssub.s32 128, 64
      %485 = vsyncadd [#allocation4], %s484
      %s486 = sshll.u32 [#allocation7], 4
      %s487 = int_to_ptr.vmem [resolvable:$true] %s486
      %492 = dma.vmem_to_hbm [thread:$0]  %s487, 64, %s2, [#allocation4], 64, 64, 4
    $region21: #{tpu_custom_call.1} parent=1 // pred_fallthru
      _
    // Predicated region
    $region22: #{tpu_custom_call.1} parent=1 // pred_check
      _
    $region23: #{tpu_custom_call.1} parent=1 // pred_check_branch
      %494 = sbr.rel (0) target = $region25
    $region24: #{tpu_custom_call.1} parent=1 // pred_region
      %495 = dma.done [#allocation4], 128
    $region25: #{tpu_custom_call.1} parent=1 // pred_fallthru
      _
    %496 = vsyncpa [#allocation3], 1
    %497 = vsyncpa [#allocation6], 1
    %498 = vsyncpa [#allocation4], 1

</llo_original>
